<compile_context>
chip_gen: v6e
topology: v6e:2x2x1
jax: 0.10.0
libtpu: 0.0.40
codegen_flags: <defaults>
</compile_context>

<pallas_src>
import numpy as np
import jax
import jax.numpy as jnp
from jax.experimental import pallas as pl
from jax.experimental.pallas import tpu as pltpu

_LANES = 128
# Minimum sublane tile per element width (f32: 8, bf16: 16, int8/fp8: 32).
_MIN_SUBLANES = {4: 8, 2: 16, 1: 32}


def _copy_kernel(x_ref, o_ref):
    # Single full-tile, lane-dense copy: no per-(c,h) slicing, no masked stores,
    # no XLU relayout. The kernel is a pure HBM<->VMEM copy.
    o_ref[...] = x_ref[...]


def _pick_tile_rows(rows, min_sub, max_rows=2048):
    """Largest power-of-two tile (multiple of min_sub, <= max_rows) dividing rows."""
    cand = max_rows
    while cand >= min_sub:
        if rows % cand == 0:
            return cand
        cand //= 2
    return rows  # unreachable on the dense fast path (rows % min_sub == 0)


def batch_flatten(x):
    """Pallas equivalent of torch.Tensor.view(N, -1) for a contiguous input."""
    N = x.shape[0]
    flat = int(np.prod(x.shape[1:])) if x.ndim > 1 else 1
    total = N * flat
    itemsize = jnp.dtype(x.dtype).itemsize
    min_sub = _MIN_SUBLANES.get(itemsize, 8)
    # Flatten has zero FLOPs; only bytes moved matter.
    cost = pl.CostEstimate(flops=0, transcendentals=0,
                           bytes_accessed=2 * total * itemsize)

    # Fast path: present the copy as a fully lane/sublane-dense 2D slab
    # (rows, 128) instead of (N, flat) with tiny N, so vreg and store-slot
    # utilization is ~100% on v5e/v6e/v7x.
    if total % _LANES == 0 and (total // _LANES) % min_sub == 0:
        rows = total // _LANES
        x2d = jnp.reshape(x, (rows, _LANES))  # metadata-only reshape (contiguous)
        tile = _pick_tile_rows(rows, min_sub)
        # tile*128*itemsize <= 2048*128*4B = 1 MiB per block; with input+output
        # double-buffering that's <= 4 MiB -> safely inside v7x's smaller
        # scoped-VMEM budget while still large enough to sit near the HBM
        # roofline; BlockSpec handles the DMA pipelining.
        grid = (rows // tile,)
        out2d = pl.pallas_call(
            _copy_kernel,
            out_shape=jax.ShapeDtypeStruct((rows, _LANES), x.dtype),
            grid=grid,
            in_specs=[pl.BlockSpec((tile, _LANES), lambda i: (i, 0))],
            out_specs=pl.BlockSpec((tile, _LANES), lambda i: (i, 0)),
            compiler_params=pltpu.CompilerParams(
                dimension_semantics=("parallel",)),  # shard copy across TCs (v7x)
            cost_estimate=cost,
        )(x2d)
        return jnp.reshape(out2d, (N, flat))

    # Fallback for ragged sizes: whole-array (N, flat) block (full-extent block
    # shapes are always legal); only taken for tiny/odd tensors.
    x2d = jnp.reshape(x, (N, flat))
    return pl.pallas_call(
        _copy_kernel,
        out_shape=jax.ShapeDtypeStruct((N, flat), x.dtype),
        in_specs=[pl.BlockSpec((N, flat), lambda: (0, 0))],
        out_specs=pl.BlockSpec((N, flat), lambda: (0, 0)),
        cost_estimate=cost,
    )(x2d)


if __name__ == "__main__":
    key = jax.random.PRNGKey(0)
    # Small shapes consistent with an MNIST-style conv feature map: NCHW.
    x = jax.random.normal(key, (2, 4, 16, 16), dtype=jnp.float32)

    out = batch_flatten(x)
    out = jax.block_until_ready(out)

    # Reference: plain reshape (what torch's .view(N, -1) does on contiguous NCHW).
    ref = jnp.reshape(x, (x.shape[0], -1))
    assert out.shape == (2, 4 * 16 * 16), out.shape
    assert out.dtype == x.dtype
    np.testing.assert_allclose(np.asarray(out), np.asarray(ref), rtol=0, atol=0)

    print("KERNEL_OK")
</pallas_src>

<mosaic_0001>
module attributes {stable_mosaic.version = 11 : i64} {
  func.func @_copy_kernel(%arg0: i32, %arg1: memref<16x128xf32, #tpu.memory_space<vmem>>, %arg2: memref<16x128xf32, #tpu.memory_space<vmem>>) attributes {dimension_semantics = [#tpu.dimension_semantics<parallel>], iteration_bounds = array<i64: 1>, scalar_prefetch = 0 : i64, scratch_operands = 0 : i64, tpu.core_type = #tpu.core_type<tc>, window_params = [{transform_indices = @transform_0, window_bounds = array<i64: 16, 128>}, {transform_indices = @transform_1, window_bounds = array<i64: 16, 128>}]} {
    %c0 = arith.constant 0 : index
    %c0_0 = arith.constant 0 : index
    %0 = vector.load %arg1[%c0, %c0_0] : memref<16x128xf32, #tpu.memory_space<vmem>>, vector<16x128xf32>
    %c0_1 = arith.constant 0 : index
    %c0_2 = arith.constant 0 : index
    %1 = vector.load %arg2[%c0_1, %c0_2] : memref<16x128xf32, #tpu.memory_space<vmem>>, vector<16x128xf32>
    tpu.vector_store %arg2[%c0_1, %c0_2], %0 {strides = array<i32>} : memref<16x128xf32, #tpu.memory_space<vmem>>, vector<16x128xf32>,
    return
  }
  func.func @transform_0(%arg0: i32) -> (i32, i32) {
    %c0_i32 = arith.constant 0 : i32
    %c0_i32_0 = arith.constant 0 : i32
    return %arg0, %c0_i32 : i32, i32
  }
  func.func @transform_1(%arg0: i32) -> (i32, i32) {
    %c0_i32 = arith.constant 0 : i32
    %c0_i32_0 = arith.constant 0 : i32
    return %arg0, %c0_i32 : i32, i32
  }
}

</mosaic_0001>

<llo_original>
// kernel: tpu_custom_call.1
$region0: #{tpu_custom_call.1}
  #allocation0 [shape = 'u32[]', space=smem, size = 0x4, offset = 0x4, fixed_abs, tag = 'smem constant byte address 0x4 - core index']
  #allocation1 [shape = 'u32[144,128]{1,0:T(1,128)}', space=vmem, size = 0x12000, scoped, tag = 'internal scratch']
  %s0 = inlined_call_operand.hbm [shape: f32[16,128], index: 0, kind: input, shape index: {}]
  %s1 = inlined_call_operand.hbm [shape: f32[16,128], index: 1, kind: output, shape index: {}]
  %s2 = sld [smem:[#allocation0]]
  $region18: #{tpu_custom_call.1} parent=0
    _
  %s4 = ssub.s32 1, %s2
  %s5 = scalar_select 0, %s4, %s2
  $region1: #{tpu_custom_call.1} parent=0
    #allocation2 [shape = 'u8[8192]{0}', space=vmem, size = 0x2000, scoped, tag = 'input window, operand 0, single buffered']
    #allocation3 [shape = 's32[1]{0}', space=sflag, size = 0x4, scoped, tag = 'scoped memory for tpu_custom_call.1']
    #allocation4 [shape = 's32[1]{0}', space=sflag, size = 0x4, scoped, tag = 'scoped memory for tpu_custom_call.1']
    #allocation5 [shape = 'u8[8192]{0}', space=vmem, size = 0x2000, scoped, tag = 'output window, operand 0, single buffered']
    %6 = vsyncpa [#allocation3], 0
    %7 = vsyncpa [#allocation4], 0
    // Predicated region
    $region2: #{tpu_custom_call.1} parent=1 // pred_check
      _
    $region3: #{tpu_custom_call.1} parent=1 // pred_check_branch
      %9 = sbr.rel (0) target = $region5
    $region4: #{tpu_custom_call.1} parent=1 // pred_region
      %s11 = ssub.s32 256, 256
      %12 = vsyncadd [#allocation3], %s11
      %s13 = sshll.u32 [#allocation2], 4
      %s14 = int_to_ptr.vmem [resolvable:$true] %s13
      %19 = dma.hbm_to_vmem [thread:$0]  %s0, 256, %s14, [#allocation3], 128, 128, 8
    $region5: #{tpu_custom_call.1} parent=1 // pred_fallthru
      _
    // Predicated region
    $region6: #{tpu_custom_call.1} parent=1 // pred_check
      _
    $region7: #{tpu_custom_call.1} parent=1 // pred_check_branch
      %21 = sbr.rel (0) target = $region9
    $region8: #{tpu_custom_call.1} parent=1 // pred_region
      %22 = dma.done [#allocation3], 256
    $region9: #{tpu_custom_call.1} parent=1 // pred_fallthru
      _
    %v23 = vld [vmem:[#allocation2] sm:$0xff]
    %v24 = vld [vmem:[#allocation2 + $0x8] sm:$0xff]
    %25 = vst [vmem:[#allocation5] sm:$0xff] %v23
    %26 = vst [vmem:[#allocation5 + $0x8] sm:$0xff] %v24
    // Predicated region
    $region10: #{tpu_custom_call.1} parent=1 // pred_check
      _
    $region11: #{tpu_custom_call.1} parent=1 // pred_check_branch
      %28 = sbr.rel (0) target = $region13
    $region12: #{tpu_custom_call.1} parent=1 // pred_region
      %s30 = ssub.s32 256, 256
      %31 = vsyncadd [#allocation4], %s30
      %s32 = sshll.u32 [#allocation5], 4
      %s33 = int_to_ptr.vmem [resolvable:$true] %s32
      %38 = dma.vmem_to_hbm [thread:$0]  %s33, 256, %s1, [#allocation4], 128, 128, 8
    $region13: #{tpu_custom_call.1} parent=1 // pred_fallthru
      _
    // Predicated region
    $region14: #{tpu_custom_call.1} parent=1 // pred_check
      _
    $region15: #{tpu_custom_call.1} parent=1 // pred_check_branch
      %40 = sbr.rel (0) target = $region17
    $region16: #{tpu_custom_call.1} parent=1 // pred_region
      %41 = dma.done [#allocation4], 256
    $region17: #{tpu_custom_call.1} parent=1 // pred_fallthru
      _
    %42 = vsyncpa [#allocation3], 1
    %43 = vsyncpa [#allocation4], 1

</llo_original>
